<compile_context>
chip_gen: v5e
topology: v5e:2x2
jax: 0.10.0
libtpu: 0.0.40
codegen_flags: <defaults>
</compile_context>

<pallas_src>
import functools

import jax
import jax.numpy as jnp
from jax.experimental import pallas as pl
from jax.experimental.pallas import tpu as pltpu

_SUBLANES = 8
_TARGET_BLOCK_BYTES = 4 * 1024 * 1024  # per input, per block
_MAX_CHUNK_ROWS = 256


def _ceil_div(a, b):
    return -(-a // b)


def _pick_chunk_rows(block_rows):
    """Largest multiple-of-8 divisor of block_rows that is <= 256."""
    if block_rows % _SUBLANES != 0:
        return block_rows
    c = min(_MAX_CHUNK_ROWS, block_rows)
    c -= c % _SUBLANES
    while c > _SUBLANES and block_rows % c != 0:
        c -= _SUBLANES
    return c


def _js_loss_kernel(pre_ref, label_ref, out_ref, *,
                    block_rows, chunk_rows, acc_rows, d_dim,
                    tiles_per_group, num_blocks, num_groups, total_rows):
    g = pl.program_id(0)          # parallel group axis
    t = pl.program_id(1)          # sequential reduction axis
    b = g * tiles_per_group + t   # global row-block index (may be phantom)

    # Output block (acc_rows, D) stays resident across the 'arbitrary' axis:
    # it is the per-group vector accumulator.
    @pl.when(t == 0)
    def _():
        out_ref[...] = jnp.zeros_like(out_ref)

    n_chunks = block_rows // chunk_rows
    fold = chunk_rows // acc_rows
    # Rows of this block that are real data (only consulted for the last block).
    rem_rows = total_rows - b * block_rows

    def chunk_term(c, masked):
        r0 = c * chunk_rows
        if n_chunks > 1:
            r0 = pl.multiple_of(r0, chunk_rows)
        pre = pre_ref[pl.ds(r0, chunk_rows), :].astype(jnp.float32)
        lab = label_ref[pl.ds(r0, chunk_rows), :].astype(jnp.float32)

        m = 0.5 * (jnp.exp(pre) + lab)
        # xlogy(m, m): contributes 0 where m == 0 (matches torch.xlogy).
        xlogy_mm = jnp.where(m > 0.0, m * jnp.log(m), 0.0)
        per_elem = xlogy_mm - 0.5 * m * (pre + jnp.log(lab + 1e-6))

        if masked:
            # Select (not multiply) so inf/NaN from Pallas-padded garbage rows
            # in the last partial block cannot leak into the accumulator.
            row = r0 + jax.lax.broadcasted_iota(jnp.int32,
                                                (chunk_rows, d_dim), 0)
            per_elem = jnp.where(row < rem_rows, per_elem, 0.0)

        if fold > 1:
            # Pure VPU sublane-group adds; no cross-lane reduce in the kernel.
            per_elem = jnp.sum(per_elem.reshape(fold, acc_rows, d_dim), axis=0)
        return per_elem

    def accumulate(masked):
        if n_chunks == 1:
            out_ref[...] += chunk_term(0, masked)
        else:
            acc = jax.lax.fori_loop(
                0, n_chunks,
                lambda c, a: a + chunk_term(c, masked),
                jnp.zeros((acc_rows, d_dim), jnp.float32),
                unroll=min(n_chunks, 4))
            out_ref[...] += acc

    has_phantom = num_groups * tiles_per_group > num_blocks   # static
    last_partial = (total_rows % block_rows) != 0             # static

    if last_partial:
        is_last = b == (num_blocks - 1)
        if has_phantom:
            fast = jnp.logical_and(b < num_blocks, jnp.logical_not(is_last))
        else:
            fast = jnp.logical_not(is_last)

        @pl.when(fast)
        def _():
            accumulate(masked=False)

        @pl.when(is_last)
        def _():
            accumulate(masked=True)
    elif has_phantom:
        @pl.when(b < num_blocks)
        def _():
            accumulate(masked=False)
    else:
        accumulate(masked=False)


def js_loss(pre, label, *, max_block_bytes=_TARGET_BLOCK_BYTES):
    """JAX/Pallas equivalent of JSLoss.forward (batchmean over dim 0)."""
    assert pre.shape == label.shape, "pre/label shape mismatch"
    batch = int(pre.shape[0])
    count = int(pre.size)
    assert count > 0

    # Natural 2D view: keep the last dim as the full lane extent (no flatten
    # to 128 lanes, no pad).  For 2D inputs this reshape is the identity.
    d = int(pre.shape[-1])
    pre2d = pre if pre.ndim == 2 else pre.reshape(-1, d)
    label2d = label if label.ndim == 2 else label.reshape(-1, d)
    total_rows = count // d

    itemsize = max(pre.dtype.itemsize, label.dtype.itemsize)
    max_rows = max(_SUBLANES,
                   (max_block_bytes // (itemsize * d)) // _SUBLANES * _SUBLANES)

    if total_rows < _SUBLANES:
        block_rows = total_rows                       # full-extent tiny block
    elif total_rows <= max_rows and total_rows % _SUBLANES == 0:
        block_rows = total_rows                       # single exact block
    else:
        block_rows = min(max_rows, (total_rows // _SUBLANES) * _SUBLANES)
        if block_rows >= _MAX_CHUNK_ROWS:             # keep chunking clean
            block_rows = (block_rows // _MAX_CHUNK_ROWS) * _MAX_CHUNK_ROWS

    num_blocks = _ceil_div(total_rows, block_rows)
    num_groups = 2 if num_blocks >= 2 else 1
    tiles_per_group = _ceil_div(num_blocks, num_groups)

    acc_rows = _SUBLANES if block_rows % _SUBLANES == 0 else block_rows
    chunk_rows = _pick_chunk_rows(block_rows)
    out_rows = num_groups * acc_rows

    def in_map(g, t):
        b = g * tiles_per_group + t
        if num_groups * tiles_per_group > num_blocks:
            b = jnp.minimum(b, num_blocks - 1)        # phantom tile -> clamp
        return (b, 0)

    kernel = functools.partial(
        _js_loss_kernel,
        block_rows=block_rows, chunk_rows=chunk_rows, acc_rows=acc_rows,
        d_dim=d, tiles_per_group=tiles_per_group, num_blocks=num_blocks,
        num_groups=num_groups, total_rows=total_rows)

    partials = pl.pallas_call(
        kernel,
        out_shape=jax.ShapeDtypeStruct((out_rows, d), jnp.float32),
        grid_spec=pltpu.PrefetchScalarGridSpec(
            num_scalar_prefetch=0,
            grid=(num_groups, tiles_per_group),
            in_specs=[
                pl.BlockSpec((block_rows, d), in_map),
                pl.BlockSpec((block_rows, d), in_map),
            ],
            out_specs=pl.BlockSpec((acc_rows, d), lambda g, t: (g, 0)),
        ),
        compiler_params=pltpu.CompilerParams(
            dimension_semantics=("parallel", "arbitrary"),
            vmem_limit_bytes=32 * 1024 * 1024,
        ),
        cost_estimate=pl.CostEstimate(
            flops=12 * count,
            transcendentals=3 * count,
            bytes_accessed=2 * count * itemsize + out_rows * d * 4,
        ),
    )(pre2d, label2d)

    # Single cheap epilogue reduce + 'batchmean' divide in the wrapper.
    return jnp.sum(partials) / jnp.float32(batch)


def _js_loss_ref(pre, label):
    """Pure-JAX reference matching the PyTorch forward."""
    pre = pre.astype(jnp.float32)
    label = label.astype(jnp.float32)
    m = 0.5 * (jnp.exp(pre) + label)

    def kl_div_batchmean(inp, tgt):
        pointwise = jnp.where(tgt > 0.0, tgt * jnp.log(tgt), 0.0) - tgt * inp
        return jnp.sum(pointwise) / inp.shape[0]

    js1 = kl_div_batchmean(pre, m)
    js2 = kl_div_batchmean(jnp.log(label + 1e-6), m)
    return 0.5 * (js1 + js2)


def _make_inputs(key, shape):
    k1, k2 = jax.random.split(key)
    pre = jax.nn.log_softmax(jax.random.normal(k1, shape, jnp.float32), axis=-1)
    lab = jax.nn.softmax(jax.random.normal(k2, shape, jnp.float32), axis=-1)
    return pre, lab


if __name__ == "__main__":
    key = jax.random.PRNGKey(0)
    k0, k1, k2 = jax.random.split(key, 3)

    # 1) Small canonical case: (batch=2, classes=128), single exact block.
    pre_a, lab_a = _make_inputs(k0, (2, 128))
    out_a = jax.block_until_ready(js_loss(pre_a, lab_a))
    ref_a = jax.block_until_ready(_js_loss_ref(pre_a, lab_a))
    assert jnp.allclose(out_a, ref_a, rtol=1e-5, atol=1e-5), (out_a, ref_a)

    # 2) Ragged rows + odd block count: forces small blocks so the partial
    #    last block (mask path), two groups and the phantom tile all run.
    pre_b, lab_b = _make_inputs(k1, (20, 128))
    out_b = jax.block_until_ready(
        js_loss(pre_b, lab_b, max_block_bytes=8 * 128 * 4))
    ref_b = jax.block_until_ready(_js_loss_ref(pre_b, lab_b))
    assert jnp.allclose(out_b, ref_b, rtol=1e-5, atol=1e-5), (out_b, ref_b)

    # 3) N-D input with a non-128-multiple last dim (no pad, full-lane block).
    pre_c, lab_c = _make_inputs(k2, (4, 3, 40))
    out_c = jax.block_until_ready(js_loss(pre_c, lab_c))
    ref_c = jax.block_until_ready(_js_loss_ref(pre_c, lab_c))
    assert jnp.allclose(out_c, ref_c, rtol=1e-5, atol=1e-5), (out_c, ref_c)

    print("KERNEL_OK")
</pallas_src>

<mosaic_0001>
module attributes {stable_mosaic.version = 11 : i64} {
  func.func @_js_loss_kernel(%arg0: i32, %arg1: i32, %arg2: memref<2x128xf32, #tpu.memory_space<vmem>>, %arg3: memref<2x128xf32, #tpu.memory_space<vmem>>, %arg4: memref<2x128xf32, #tpu.memory_space<vmem>>) attributes {dimension_semantics = [#tpu.dimension_semantics<parallel>, #tpu.dimension_semantics<arbitrary>], iteration_bounds = array<i64: 1, 1>, scalar_prefetch = 0 : i64, scratch_operands = 0 : i64, tpu.core_type = #tpu.core_type<tc>, window_params = [{transform_indices = @transform_0, window_bounds = array<i64: 2, 128>}, {transform_indices = @transform_1, window_bounds = array<i64: 2, 128>}, {transform_indices = @transform_2, window_bounds = array<i64: 2, 128>}]} {
    %c0_i32 = arith.constant 0 : i32
    %0 = arith.cmpi eq, %arg1, %c0_i32 : i32
    %1 = arith.extui %0 : i1 to i32
    %c0_i32_0 = arith.constant 0 : i32
    %2 = arith.cmpi ne, %1, %c0_i32_0 : i32
    scf.if %2 {
      %cst_12 = arith.constant 0.000000e+00 : f32
      %26 = vector.broadcast %cst_12 : f32 to vector<2x128xf32>
      %c0_13 = arith.constant 0 : index
      %c0_14 = arith.constant 0 : index
      %27 = vector.load %arg4[%c0_13, %c0_14] : memref<2x128xf32, #tpu.memory_space<vmem>>, vector<2x128xf32>
      tpu.vector_store %arg4[%c0_13, %c0_14], %26 {strides = array<i32>} : memref<2x128xf32, #tpu.memory_space<vmem>>, vector<2x128xf32>,
    } else {
    }
    %c0 = arith.constant 0 : index
    %c0_1 = arith.constant 0 : index
    %3 = vector.load %arg4[%c0, %c0_1] : memref<2x128xf32, #tpu.memory_space<vmem>>, vector<2x128xf32>
    %c0_2 = arith.constant 0 : index
    %c0_3 = arith.constant 0 : index
    %4 = vector.load %arg2[%c0_2, %c0_3] : memref<2x128xf32, #tpu.memory_space<vmem>>, vector<2x128xf32>
    %c0_4 = arith.constant 0 : index
    %c0_5 = arith.constant 0 : index
    %5 = vector.load %arg3[%c0_4, %c0_5] : memref<2x128xf32, #tpu.memory_space<vmem>>, vector<2x128xf32>
    %6 = math.exp %4 : vector<2x128xf32>
    %7 = arith.addf %6, %5 : vector<2x128xf32>
    %cst = arith.constant 5.000000e-01 : f32
    %8 = vector.broadcast %cst : f32 to vector<2x128xf32>
    %9 = arith.mulf %8, %7 : vector<2x128xf32>
    %cst_6 = arith.constant 0.000000e+00 : f32
    %10 = vector.broadcast %cst_6 : f32 to vector<2x128xf32>
    %11 = arith.cmpf ogt, %9, %10 : vector<2x128xf32>
    %12 = math.log %9 : vector<2x128xf32>
    %13 = arith.mulf %9, %12 : vector<2x128xf32>
    %cst_7 = arith.constant 0.000000e+00 : f32
    %14 = vector.broadcast %cst_7 : f32 to vector<2x128xf32>
    %15 = arith.select %11, %13, %14 : vector<2x128xi1>, vector<2x128xf32>
    %cst_8 = arith.constant 5.000000e-01 : f32
    %16 = vector.broadcast %cst_8 : f32 to vector<2x128xf32>
    %17 = arith.mulf %16, %9 : vector<2x128xf32>
    %cst_9 = arith.constant 9.99999997E-7 : f32
    %18 = vector.broadcast %cst_9 : f32 to vector<2x128xf32>
    %19 = arith.addf %5, %18 : vector<2x128xf32>
    %20 = math.log %19 : vector<2x128xf32>
    %21 = arith.addf %4, %20 : vector<2x128xf32>
    %22 = arith.mulf %17, %21 : vector<2x128xf32>
    %23 = arith.subf %15, %22 : vector<2x128xf32>
    %24 = arith.addf %3, %23 : vector<2x128xf32>
    %c0_10 = arith.constant 0 : index
    %c0_11 = arith.constant 0 : index
    %25 = vector.load %arg4[%c0_10, %c0_11] : memref<2x128xf32, #tpu.memory_space<vmem>>, vector<2x128xf32>
    tpu.vector_store %arg4[%c0_10, %c0_11], %24 {strides = array<i32>} : memref<2x128xf32, #tpu.memory_space<vmem>>, vector<2x128xf32>,
    return
  }
  func.func @transform_0(%arg0: i32, %arg1: i32) -> (i32, i32) {
    %c1_i32 = arith.constant 1 : i32
    %0 = arith.muli %arg0, %c1_i32 : i32
    %1 = arith.addi %0, %arg1 : i32
    %c0_i32 = arith.constant 0 : i32
    %c0_i32_0 = arith.constant 0 : i32
    return %1, %c0_i32 : i32, i32
  }
  func.func @transform_1(%arg0: i32, %arg1: i32) -> (i32, i32) {
    %c1_i32 = arith.constant 1 : i32
    %0 = arith.muli %arg0, %c1_i32 : i32
    %1 = arith.addi %0, %arg1 : i32
    %c0_i32 = arith.constant 0 : i32
    %c0_i32_0 = arith.constant 0 : i32
    return %1, %c0_i32 : i32, i32
  }
  func.func @transform_2(%arg0: i32, %arg1: i32) -> (i32, i32) {
    %c0_i32 = arith.constant 0 : i32
    %c0_i32_0 = arith.constant 0 : i32
    return %arg0, %c0_i32 : i32, i32
  }
}

</mosaic_0001>

<llo_original>
// kernel: tpu_custom_call.1
$region0: #{tpu_custom_call.1}
  #allocation0 [shape = 'u32[]', space=smem, size = 0x4, offset = 0x4, fixed_abs, tag = 'smem constant byte address 0x4 - core index']
  #allocation1 [shape = 'u32[72,128]{1,0:T(1,128)}', space=vmem, size = 0x9000, scoped, tag = 'internal scratch']
  %s0 = inlined_call_operand.hbm [shape: f32[2,128], index: 0, kind: input, shape index: {}]
  %s1 = inlined_call_operand.hbm [shape: f32[2,128], index: 1, kind: input, shape index: {}]
  %s2 = inlined_call_operand.hbm [shape: f32[2,128], index: 2, kind: output, shape index: {}]
  %s3 = sld [smem:[#allocation0]]
  $region30: #{tpu_custom_call.1} parent=0
    _
  %s5 = ssub.s32 1, %s3
  %s6 = scalar_select 0, %s5, %s3
  $region1: #{tpu_custom_call.1} parent=0
    #allocation2 [shape = 'u8[1024]{0}', space=vmem, size = 0x400, scoped, tag = 'input window, operand 0, single buffered']
    #allocation3 [shape = 's32[1]{0}', space=sflag, size = 0x4, scoped, tag = 'scoped memory for tpu_custom_call.1']
    #allocation4 [shape = 's32[1]{0}', space=sflag, size = 0x4, scoped, tag = 'scoped memory for tpu_custom_call.1']
    #allocation5 [shape = 'u8[1024]{0}', space=vmem, size = 0x400, scoped, tag = 'input window, operand 1, single buffered']
    #allocation6 [shape = 's32[1]{0}', space=sflag, size = 0x4, scoped, tag = 'scoped memory for tpu_custom_call.1']
    #allocation7 [shape = 'u8[1024]{0}', space=vmem, size = 0x400, scoped, tag = 'output window, operand 0, single buffered']
    %7 = vsyncpa [#allocation3], 0
    %8 = vsyncpa [#allocation6], 0
    %9 = vsyncpa [#allocation4], 0
    // Predicated region
    $region2: #{tpu_custom_call.1} parent=1 // pred_check
      _
    $region3: #{tpu_custom_call.1} parent=1 // pred_check_branch
      %11 = sbr.rel (0) target = $region5
    $region4: #{tpu_custom_call.1} parent=1 // pred_region
      %s12 = sadd.s32 0, 0
      %14 = vsyncadd [#allocation3], 0
      %s15 = smul.addr %s12, 2
      %s16 = scalar_lea.hbm %s0, %s15
      %s18 = sshll.u32 %s16, 4
      %s19 = int_to_ptr.hbm [resolvable:$true] %s18
      %s20 = sshll.u32 [#allocation2], 4
      %s21 = int_to_ptr.vmem [resolvable:$true] %s20
      %23 = dma.hbm_to_vmem [thread:$0]  %s19, 32, %s21, [#allocation3]
    $region5: #{tpu_custom_call.1} parent=1 // pred_fallthru
      _
    // Predicated region
    $region6: #{tpu_custom_call.1} parent=1 // pred_check
      _
    $region7: #{tpu_custom_call.1} parent=1 // pred_check_branch
      %25 = sbr.rel (0) target = $region9
    $region8: #{tpu_custom_call.1} parent=1 // pred_region
      %s26 = sadd.s32 0, 0
      %28 = vsyncadd [#allocation6], 0
      %s29 = smul.addr %s26, 2
      %s30 = scalar_lea.hbm %s1, %s29
      %s32 = sshll.u32 %s30, 4
      %s33 = int_to_ptr.hbm [resolvable:$true] %s32
      %s34 = sshll.u32 [#allocation5], 4
      %s35 = int_to_ptr.vmem [resolvable:$true] %s34
      %37 = dma.hbm_to_vmem [thread:$0]  %s33, 32, %s35, [#allocation6]
    $region9: #{tpu_custom_call.1} parent=1 // pred_fallthru
      _
    // Predicated region
    $region10: #{tpu_custom_call.1} parent=1 // pred_check
      _
    $region11: #{tpu_custom_call.1} parent=1 // pred_check_branch
      %39 = sbr.rel (0) target = $region13
    $region12: #{tpu_custom_call.1} parent=1 // pred_region
      %41 = dma.done [#allocation3], 32
    $region13: #{tpu_custom_call.1} parent=1 // pred_fallthru
      _
    // Predicated region
    $region14: #{tpu_custom_call.1} parent=1 // pred_check
      _
    $region15: #{tpu_custom_call.1} parent=1 // pred_check_branch
      %43 = sbr.rel (0) target = $region17
    $region16: #{tpu_custom_call.1} parent=1 // pred_region
      %45 = dma.done [#allocation6], 32
    $region17: #{tpu_custom_call.1} parent=1 // pred_fallthru
      _
    %s46 = sadd.s32 0, 0
    %s47 = sadd.s32 0, 0
    %p48 = scmp.eq.s32.totalorder 0, 0
    // Predicated region
    $region18: #{tpu_custom_call.1} parent=1 // pred_check
      %p49 = pneg %p48
    $region19: #{tpu_custom_call.1} parent=1 // pred_check_branch
      %51 = sbr.rel (%p49) target = $region21
    $region20: #{tpu_custom_call.1} parent=1 // pred_region
      %52 = vst [vmem:[#allocation7] sm:$0x3] 0.0
    $region21: #{tpu_custom_call.1} parent=1 // pred_fallthru
      _
    %v53 = vld [vmem:[#allocation7] sm:$0x3]
    %v54 = vld [vmem:[#allocation2] sm:$0x3]
    %v55 = vld [vmem:[#allocation5] sm:$0x3]
    %v56 = vmul.f32 %v54, 1.442695
    %v57 = vpow.pop %v56
    %v58 = vadd.f32 %v57, %v55
    %v59 = vmul.f32 %v58, 0.5
    %vm60 = vcmp.gt.f32.partialorder %v59, 0.0
    %v61 = vlog2.pop %v59
    %v62 = vmul.f32 %v61, 0.6931472
    %v63 = vmul.f32 %v59, %v62
    %v64 = vsel %vm60, %v63, 0.0
    %v65 = vmul.f32 %v59, 0.5
    %v66 = vadd.f32 %v55, 1e-06
    %v67 = vlog2.pop %v66
    %v68 = vmul.f32 %v67, 0.6931472
    %v69 = vadd.f32 %v54, %v68
    %v70 = vmul.f32 %v65, %v69
    %v71 = vsub.f32 %v64, %v70
    %v72 = vadd.f32 %v53, %v71
    %73 = vst [vmem:[#allocation7] sm:$0x3] %v72
    // Predicated region
    $region22: #{tpu_custom_call.1} parent=1 // pred_check
      _
    $region23: #{tpu_custom_call.1} parent=1 // pred_check_branch
      %75 = sbr.rel (0) target = $region25
    $region24: #{tpu_custom_call.1} parent=1 // pred_region
      %77 = vsyncadd [#allocation4], 0
      %s79 = sshll.u32 [#allocation7], 4
      %s80 = int_to_ptr.vmem [resolvable:$true] %s79
      %s81 = sshll.u32 %s2, 4
      %s82 = int_to_ptr.hbm [resolvable:$true] %s81
      %84 = dma.vmem_to_hbm [thread:$0]  %s80, 32, %s82, [#allocation4]
    $region25: #{tpu_custom_call.1} parent=1 // pred_fallthru
      _
    // Predicated region
    $region26: #{tpu_custom_call.1} parent=1 // pred_check
      _
    $region27: #{tpu_custom_call.1} parent=1 // pred_check_branch
      %86 = sbr.rel (0) target = $region29
    $region28: #{tpu_custom_call.1} parent=1 // pred_region
      %88 = dma.done [#allocation4], 32
    $region29: #{tpu_custom_call.1} parent=1 // pred_fallthru
      _
    %89 = vsyncpa [#allocation3], 1
    %90 = vsyncpa [#allocation6], 1
    %91 = vsyncpa [#allocation4], 1

</llo_original>
